<compile_context>
chip_gen: v7x
topology: tpu7x:2x2x1
jax: 0.10.0
libtpu: 0.0.40
codegen_flags: <defaults>
</compile_context>

<pallas_src>
import jax
import jax.numpy as jnp
from jax.experimental import pallas as pl
from jax.experimental.pallas import tpu as pltpu


def _transition_kernel(x_ref, w_ref, b_ref, o_ref):
    """One grid step.

    x_ref: (NB, C_in, D, HW)  VMEM block (HW=110 lane-dense).
    w_ref: (C_out, C_in)      SMEM scalar weight table.
    b_ref: (C_out,)           SMEM.
    o_ref: (NB, C_out, D, HW) VMEM block.
    """
    x = x_ref[...].astype(jnp.float32)            # (NB, C_in, D, HW)
    nb, c_in, d, hw = x.shape
    c_out = o_ref.shape[1]
    inv_hw = 1.0 / float(hw)

    # LayerNorm over the flattened (H*W) window: biased variance, eps=1e-5,
    # no affine.  One-pass stats: the two lane reductions are independent.
    s1 = jnp.sum(x, axis=-1, keepdims=True)        # (NB, C_in, D, 1)
    s2 = jnp.sum(x * x, axis=-1, keepdims=True)    # (NB, C_in, D, 1)
    mean = s1 * inv_hw
    var = jnp.maximum(s2 * inv_hw - mean * mean, 0.0)   # clamp cancellation
    y = (x - mean) * jax.lax.rsqrt(var + 1e-5)
    y = jnp.maximum(y, 0.0)                        # ReLU

    # 1x1x1 Conv3d == channel mix.  Channels are tiny, so skip the MXU and do
    # C_out*C_in scalar-broadcast FMAs on the VPU; one full (NB, D, HW) store
    # per output channel (no stacked-output relayout).
    for o in range(c_out):
        acc = w_ref[o, 0] * y[:, 0]
        for c in range(1, c_in):
            acc = acc + w_ref[o, c] * y[:, c]
        o_ref[:, o] = (acc + b_ref[o]).astype(o_ref.dtype)


def _is_multi_tensorcore_chip():
    # v7x is the only listed generation with 2 TensorCores per chip.
    try:
        return "v7" in jax.devices()[0].device_kind.lower()
    except Exception:
        return False


def transition_block_fre(x, conv_w, conv_b):
    """x: (N, C_in, D, H, W); conv_w: (C_out, C_in, 1, 1, 1); conv_b: (C_out,)."""
    N, C_in, D, H, W = x.shape
    C_out = conv_w.shape[0]
    HW = H * W

    # Free trailing-dim collapse (no XLA copy): HW=110 lands on the lane axis.
    x2 = x.reshape(N, C_in, D, HW)
    w2d = conv_w.reshape(C_out, C_in).astype(jnp.float32)   # tiny scalar table
    b1d = conv_b.reshape(C_out).astype(jnp.float32)
    out_dtype = x.dtype

    if _is_multi_tensorcore_chip() and N > 1:
        # v7x: one batch element per grid step, sharded across the 2 TCs.
        grid = (N,)
        in_spec_x = pl.BlockSpec((1, C_in, D, HW), lambda n: (n, 0, 0, 0))
        out_spec = pl.BlockSpec((1, C_out, D, HW), lambda n: (n, 0, 0, 0))
        dim_sem = ("parallel",)
    else:
        # v5e/v6e (single TC): one grid step covering the whole batch.
        grid = (1,)
        in_spec_x = pl.BlockSpec((N, C_in, D, HW), lambda n: (0, 0, 0, 0))
        out_spec = pl.BlockSpec((N, C_out, D, HW), lambda n: (0, 0, 0, 0))
        dim_sem = ("arbitrary",)

    itemsize = jnp.dtype(out_dtype).itemsize
    cost = pl.CostEstimate(
        flops=N * D * HW * (C_in * 8 + 2 * C_out * C_in),
        transcendentals=N * C_in * D,                     # rsqrt per LN window
        bytes_accessed=(N * C_in * D * HW + N * C_out * D * HW) * itemsize
        + (C_out * C_in + C_out) * 4,
    )

    out = pl.pallas_call(
        _transition_kernel,
        out_shape=jax.ShapeDtypeStruct((N, C_out, D, HW), out_dtype),
        grid=grid,
        in_specs=[
            in_spec_x,
            pl.BlockSpec(memory_space=pltpu.MemorySpace.SMEM),
            pl.BlockSpec(memory_space=pltpu.MemorySpace.SMEM),
        ],
        out_specs=out_spec,
        compiler_params=pltpu.CompilerParams(dimension_semantics=dim_sem),
        cost_estimate=cost,
    )(x2, w2d, b1d)

    # Free trailing-dim split back to the native NCDHW layout.
    return out.reshape(N, C_out, D, H, W)


def _reference(x, conv_w, conv_b):
    # Pure-JAX reference of the PyTorch forward pass.
    xf = x.astype(jnp.float32)
    mean = jnp.mean(xf, axis=(-2, -1), keepdims=True)
    var = jnp.mean((xf - mean) ** 2, axis=(-2, -1), keepdims=True)
    y = (xf - mean) / jnp.sqrt(var + 1e-5)
    y = jnp.maximum(y, 0.0)
    w = conv_w.reshape(conv_w.shape[0], conv_w.shape[1]).astype(jnp.float32)
    out = jnp.einsum("oc,ncdhw->nodhw", w, y) + conv_b.astype(jnp.float32)[None, :, None, None, None]
    return out.astype(x.dtype)


if __name__ == "__main__":
    # H=10, W=11 are fixed by LayerNorm([10, 11]); small N/C/D otherwise.
    N, C_in, C_out, D, H, W = 2, 4, 8, 3, 10, 11

    key = jax.random.PRNGKey(0)
    kx, kw, kb = jax.random.split(key, 3)
    x = jax.random.normal(kx, (N, C_in, D, H, W), dtype=jnp.float32)
    conv_w = jax.random.normal(kw, (C_out, C_in, 1, 1, 1), dtype=jnp.float32) * 0.1
    conv_b = jax.random.normal(kb, (C_out,), dtype=jnp.float32) * 0.1

    out = transition_block_fre(x, conv_w, conv_b)
    out = jax.block_until_ready(out)

    ref = _reference(x, conv_w, conv_b)
    assert out.shape == (N, C_out, D, H, W), out.shape
    assert jnp.allclose(out, ref, atol=1e-4, rtol=1e-4), float(jnp.max(jnp.abs(out - ref)))

    print("KERNEL_OK")
</pallas_src>

<mosaic_0001>
module attributes {stable_mosaic.version = 11 : i64} {
  func.func @_transition_kernel(%arg0: i32, %arg1: memref<2x4x3x110xf32, #tpu.memory_space<vmem>>, %arg2: memref<8x4xf32, #tpu.memory_space<smem>>, %arg3: memref<8xf32, #tpu.memory_space<smem>>, %arg4: memref<2x8x3x110xf32, #tpu.memory_space<vmem>>) attributes {dimension_semantics = [#tpu.dimension_semantics<arbitrary>], iteration_bounds = array<i64: 1>, scalar_prefetch = 0 : i64, scratch_operands = 0 : i64, tpu.core_type = #tpu.core_type<tc>, window_params = [{pipeline_mode = #tpu.pipeline_mode<synchronous>, transform_indices = @transform_0, window_bounds = array<i64: 2, 4, 3, 110>}, {transform_indices = @transform_1, window_bounds = array<i64: 8, 4>}, {transform_indices = @transform_2, window_bounds = array<i64: 8>}, {pipeline_mode = #tpu.pipeline_mode<synchronous>, transform_indices = @transform_3, window_bounds = array<i64: 2, 8, 3, 110>}]} {
    %c0 = arith.constant 0 : index
    %c0_0 = arith.constant 0 : index
    %c0_1 = arith.constant 0 : index
    %c0_2 = arith.constant 0 : index
    %0 = vector.load %arg1[%c0, %c0_0, %c0_1, %c0_2] : memref<2x4x3x110xf32, #tpu.memory_space<vmem>>, vector<2x4x3x110xf32>
    %cst = arith.constant dense<0.000000e+00> : vector<2x4x3xf32>
    %1 = vector.multi_reduction <add>, %0, %cst [3] : vector<2x4x3x110xf32> to vector<2x4x3xf32>
    %2 = vector.shape_cast %1 : vector<2x4x3xf32> to vector<2x4x3x1xf32>
    %3 = arith.mulf %0, %0 : vector<2x4x3x110xf32>
    %cst_3 = arith.constant dense<0.000000e+00> : vector<2x4x3xf32>
    %4 = vector.multi_reduction <add>, %3, %cst_3 [3] : vector<2x4x3x110xf32> to vector<2x4x3xf32>
    %5 = vector.shape_cast %4 : vector<2x4x3xf32> to vector<2x4x3x1xf32>
    %cst_4 = arith.constant 0.0090909088 : f32
    %6 = vector.broadcast %cst_4 : f32 to vector<2x4x3x1xf32>
    %7 = arith.mulf %2, %6 : vector<2x4x3x1xf32>
    %cst_5 = arith.constant 0.0090909088 : f32
    %8 = vector.broadcast %cst_5 : f32 to vector<2x4x3x1xf32>
    %9 = arith.mulf %5, %8 : vector<2x4x3x1xf32>
    %10 = arith.mulf %7, %7 : vector<2x4x3x1xf32>
    %11 = arith.subf %9, %10 : vector<2x4x3x1xf32>
    %cst_6 = arith.constant 0.000000e+00 : f32
    %12 = vector.broadcast %cst_6 : f32 to vector<2x4x3x1xf32>
    %13 = arith.maximumf %11, %12 : vector<2x4x3x1xf32>
    %14 = vector.broadcast %7 : vector<2x4x3x1xf32> to vector<2x4x3x110xf32>
    %15 = arith.subf %0, %14 : vector<2x4x3x110xf32>
    %cst_7 = arith.constant 9.99999974E-6 : f32
    %16 = vector.broadcast %cst_7 : f32 to vector<2x4x3x1xf32>
    %17 = arith.addf %13, %16 : vector<2x4x3x1xf32>
    %18 = math.rsqrt %17 : vector<2x4x3x1xf32>
    %19 = vector.broadcast %18 : vector<2x4x3x1xf32> to vector<2x4x3x110xf32>
    %20 = arith.mulf %15, %19 : vector<2x4x3x110xf32>
    %cst_8 = arith.constant 0.000000e+00 : f32
    %21 = vector.broadcast %cst_8 : f32 to vector<2x4x3x110xf32>
    %22 = arith.maximumf %20, %21 : vector<2x4x3x110xf32>
    %c0_9 = arith.constant 0 : index
    %c0_10 = arith.constant 0 : index
    %23 = memref.load %arg2[%c0_9, %c0_10] : memref<8x4xf32, #tpu.memory_space<smem>>
    %24 = vector.extract_strided_slice %22 {offsets = [0, 0, 0, 0], sizes = [2, 1, 3, 110], strides = [1, 1, 1, 1]} : vector<2x4x3x110xf32> to vector<2x1x3x110xf32>
    %25 = vector.shape_cast %24 : vector<2x1x3x110xf32> to vector<2x3x110xf32>
    %26 = vector.broadcast %23 : f32 to vector<2x3x110xf32>
    %27 = arith.mulf %26, %25 : vector<2x3x110xf32>
    %c0_11 = arith.constant 0 : index
    %c1 = arith.constant 1 : index
    %28 = memref.load %arg2[%c0_11, %c1] : memref<8x4xf32, #tpu.memory_space<smem>>
    %29 = vector.extract_strided_slice %22 {offsets = [0, 1, 0, 0], sizes = [2, 1, 3, 110], strides = [1, 1, 1, 1]} : vector<2x4x3x110xf32> to vector<2x1x3x110xf32>
    %30 = vector.shape_cast %29 : vector<2x1x3x110xf32> to vector<2x3x110xf32>
    %31 = vector.broadcast %28 : f32 to vector<2x3x110xf32>
    %32 = arith.mulf %31, %30 : vector<2x3x110xf32>
    %33 = arith.addf %27, %32 : vector<2x3x110xf32>
    %c0_12 = arith.constant 0 : index
    %c2 = arith.constant 2 : index
    %34 = memref.load %arg2[%c0_12, %c2] : memref<8x4xf32, #tpu.memory_space<smem>>
    %35 = vector.extract_strided_slice %22 {offsets = [0, 2, 0, 0], sizes = [2, 1, 3, 110], strides = [1, 1, 1, 1]} : vector<2x4x3x110xf32> to vector<2x1x3x110xf32>
    %36 = vector.shape_cast %35 : vector<2x1x3x110xf32> to vector<2x3x110xf32>
    %37 = vector.broadcast %34 : f32 to vector<2x3x110xf32>
    %38 = arith.mulf %37, %36 : vector<2x3x110xf32>
    %39 = arith.addf %33, %38 : vector<2x3x110xf32>
    %c0_13 = arith.constant 0 : index
    %c3 = arith.constant 3 : index
    %40 = memref.load %arg2[%c0_13, %c3] : memref<8x4xf32, #tpu.memory_space<smem>>
    %41 = vector.extract_strided_slice %22 {offsets = [0, 3, 0, 0], sizes = [2, 1, 3, 110], strides = [1, 1, 1, 1]} : vector<2x4x3x110xf32> to vector<2x1x3x110xf32>
    %42 = vector.shape_cast %41 : vector<2x1x3x110xf32> to vector<2x3x110xf32>
    %43 = vector.broadcast %40 : f32 to vector<2x3x110xf32>
    %44 = arith.mulf %43, %42 : vector<2x3x110xf32>
    %45 = arith.addf %39, %44 : vector<2x3x110xf32>
    %c0_14 = arith.constant 0 : index
    %46 = memref.load %arg3[%c0_14] : memref<8xf32, #tpu.memory_space<smem>>
    %47 = vector.broadcast %46 : f32 to vector<2x3x110xf32>
    %48 = arith.addf %45, %47 : vector<2x3x110xf32>
    %c0_15 = arith.constant 0 : index
    %c0_16 = arith.constant 0 : index
    %c0_17 = arith.constant 0 : index
    %c0_18 = arith.constant 0 : index
    %49 = vector.load %arg4[%c0_15, %c0_16, %c0_17, %c0_18] : memref<2x8x3x110xf32, #tpu.memory_space<vmem>>, vector<2x1x3x110xf32>
    %50 = vector.shape_cast %49 : vector<2x1x3x110xf32> to vector<2x3x110xf32>
    %51 = vector.shape_cast %48 : vector<2x3x110xf32> to vector<2x1x3x110xf32>
    tpu.vector_store %arg4[%c0_15, %c0_16, %c0_17, %c0_18], %51 {strides = array<i32>} : memref<2x8x3x110xf32, #tpu.memory_space<vmem>>, vector<2x1x3x110xf32>,
    %c1_19 = arith.constant 1 : index
    %c0_20 = arith.constant 0 : index
    %52 = memref.load %arg2[%c1_19, %c0_20] : memref<8x4xf32, #tpu.memory_space<smem>>
    %53 = vector.extract_strided_slice %22 {offsets = [0, 0, 0, 0], sizes = [2, 1, 3, 110], strides = [1, 1, 1, 1]} : vector<2x4x3x110xf32> to vector<2x1x3x110xf32>
    %54 = vector.shape_cast %53 : vector<2x1x3x110xf32> to vector<2x3x110xf32>
    %55 = vector.broadcast %52 : f32 to vector<2x3x110xf32>
    %56 = arith.mulf %55, %54 : vector<2x3x110xf32>
    %c1_21 = arith.constant 1 : index
    %c1_22 = arith.constant 1 : index
    %57 = memref.load %arg2[%c1_21, %c1_22] : memref<8x4xf32, #tpu.memory_space<smem>>
    %58 = vector.extract_strided_slice %22 {offsets = [0, 1, 0, 0], sizes = [2, 1, 3, 110], strides = [1, 1, 1, 1]} : vector<2x4x3x110xf32> to vector<2x1x3x110xf32>
    %59 = vector.shape_cast %58 : vector<2x1x3x110xf32> to vector<2x3x110xf32>
    %60 = vector.broadcast %57 : f32 to vector<2x3x110xf32>
    %61 = arith.mulf %60, %59 : vector<2x3x110xf32>
    %62 = arith.addf %56, %61 : vector<2x3x110xf32>
    %c1_23 = arith.constant 1 : index
    %c2_24 = arith.constant 2 : index
    %63 = memref.load %arg2[%c1_23, %c2_24] : memref<8x4xf32, #tpu.memory_space<smem>>
    %64 = vector.extract_strided_slice %22 {offsets = [0, 2, 0, 0], sizes = [2, 1, 3, 110], strides = [1, 1, 1, 1]} : vector<2x4x3x110xf32> to vector<2x1x3x110xf32>
    %65 = vector.shape_cast %64 : vector<2x1x3x110xf32> to vector<2x3x110xf32>
    %66 = vector.broadcast %63 : f32 to vector<2x3x110xf32>
    %67 = arith.mulf %66, %65 : vector<2x3x110xf32>
    %68 = arith.addf %62, %67 : vector<2x3x110xf32>
    %c1_25 = arith.constant 1 : index
    %c3_26 = arith.constant 3 : index
    %69 = memref.load %arg2[%c1_25, %c3_26] : memref<8x4xf32, #tpu.memory_space<smem>>
    %70 = vector.extract_strided_slice %22 {offsets = [0, 3, 0, 0], sizes = [2, 1, 3, 110], strides = [1, 1, 1, 1]} : vector<2x4x3x110xf32> to vector<2x1x3x110xf32>
    %71 = vector.shape_cast %70 : vector<2x1x3x110xf32> to vector<2x3x110xf32>
    %72 = vector.broadcast %69 : f32 to vector<2x3x110xf32>
    %73 = arith.mulf %72, %71 : vector<2x3x110xf32>
    %74 = arith.addf %68, %73 : vector<2x3x110xf32>
    %c1_27 = arith.constant 1 : index
    %75 = memref.load %arg3[%c1_27] : memref<8xf32, #tpu.memory_space<smem>>
    %76 = vector.broadcast %75 : f32 to vector<2x3x110xf32>
    %77 = arith.addf %74, %76 : vector<2x3x110xf32>
    %c0_28 = arith.constant 0 : index
    %c1_29 = arith.constant 1 : index
    %c0_30 = arith.constant 0 : index
    %c0_31 = arith.constant 0 : index
    %78 = vector.load %arg4[%c0_28, %c1_29, %c0_30, %c0_31] : memref<2x8x3x110xf32, #tpu.memory_space<vmem>>, vector<2x1x3x110xf32>
    %79 = vector.shape_cast %78 : vector<2x1x3x110xf32> to vector<2x3x110xf32>
    %80 = vector.shape_cast %77 : vector<2x3x110xf32> to vector<2x1x3x110xf32>
    tpu.vector_store %arg4[%c0_28, %c1_29, %c0_30, %c0_31], %80 {strides = array<i32>} : memref<2x8x3x110xf32, #tpu.memory_space<vmem>>, vector<2x1x3x110xf32>,
    %c2_32 = arith.constant 2 : index
    %c0_33 = arith.constant 0 : index
    %81 = memref.load %arg2[%c2_32, %c0_33] : memref<8x4xf32, #tpu.memory_space<smem>>
    %82 = vector.extract_strided_slice %22 {offsets = [0, 0, 0, 0], sizes = [2, 1, 3, 110], strides = [1, 1, 1, 1]} : vector<2x4x3x110xf32> to vector<2x1x3x110xf32>
    %83 = vector.shape_cast %82 : vector<2x1x3x110xf32> to vector<2x3x110xf32>
    %84 = vector.broadcast %81 : f32 to vector<2x3x110xf32>
    %85 = arith.mulf %84, %83 : vector<2x3x110xf32>
    %c2_34 = arith.constant 2 : index
    %c1_35 = arith.constant 1 : index
    %86 = memref.load %arg2[%c2_34, %c1_35] : memref<8x4xf32, #tpu.memory_space<smem>>
    %87 = vector.extract_strided_slice %22 {offsets = [0, 1, 0, 0], sizes = [2, 1, 3, 110], strides = [1, 1, 1, 1]} : vector<2x4x3x110xf32> to vector<2x1x3x110xf32>
    %88 = vector.shape_cast %87 : vector<2x1x3x110xf32> to vector<2x3x110xf32>
    %89 = vector.broadcast %86 : f32 to vector<2x3x110xf32>
    %90 = arith.mulf %89, %88 : vector<2x3x110xf32>
    %91 = arith.addf %85, %90 : vector<2x3x110xf32>
    %c2_36 = arith.constant 2 : index
    %c2_37 = arith.constant 2 : index
    %92 = memref.load %arg2[%c2_36, %c2_37] : memref<8x4xf32, #tpu.memory_space<smem>>
    %93 = vector.extract_strided_slice %22 {offsets = [0, 2, 0, 0], sizes = [2, 1, 3, 110], strides = [1, 1, 1, 1]} : vector<2x4x3x110xf32> to vector<2x1x3x110xf32>
    %94 = vector.shape_cast %93 : vector<2x1x3x110xf32> to vector<2x3x110xf32>
    %95 = vector.broadcast %92 : f32 to vector<2x3x110xf32>
    %96 = arith.mulf %95, %94 : vector<2x3x110xf32>
    %97 = arith.addf %91, %96 : vector<2x3x110xf32>
    %c2_38 = arith.constant 2 : index
    %c3_39 = arith.constant 3 : index
    %98 = memref.load %arg2[%c2_38, %c3_39] : memref<8x4xf32, #tpu.memory_space<smem>>
    %99 = vector.extract_strided_slice %22 {offsets = [0, 3, 0, 0], sizes = [2, 1, 3, 110], strides = [1, 1, 1, 1]} : vector<2x4x3x110xf32> to vector<2x1x3x110xf32>
    %100 = vector.shape_cast %99 : vector<2x1x3x110xf32> to vector<2x3x110xf32>
    %101 = vector.broadcast %98 : f32 to vector<2x3x110xf32>
    %102 = arith.mulf %101, %100 : vector<2x3x110xf32>
    %103 = arith.addf %97, %102 : vector<2x3x110xf32>
    %c2_40 = arith.constant 2 : index
    %104 = memref.load %arg3[%c2_40] : memref<8xf32, #tpu.memory_space<smem>>
    %105 = vector.broadcast %104 : f32 to vector<2x3x110xf32>
    %106 = arith.addf %103, %105 : vector<2x3x110xf32>
    %c0_41 = arith.constant 0 : index
    %c2_42 = arith.constant 2 : index
    %c0_43 = arith.constant 0 : index
    %c0_44 = arith.constant 0 : index
    %107 = vector.load %arg4[%c0_41, %c2_42, %c0_43, %c0_44] : memref<2x8x3x110xf32, #tpu.memory_space<vmem>>, vector<2x1x3x110xf32>
    %108 = vector.shape_cast %107 : vector<2x1x3x110xf32> to vector<2x3x110xf32>
    %109 = vector.shape_cast %106 : vector<2x3x110xf32> to vector<2x1x3x110xf32>
    tpu.vector_store %arg4[%c0_41, %c2_42, %c0_43, %c0_44], %109 {strides = array<i32>} : memref<2x8x3x110xf32, #tpu.memory_space<vmem>>, vector<2x1x3x110xf32>,
    %c3_45 = arith.constant 3 : index
    %c0_46 = arith.constant 0 : index
    %110 = memref.load %arg2[%c3_45, %c0_46] : memref<8x4xf32, #tpu.memory_space<smem>>
    %111 = vector.extract_strided_slice %22 {offsets = [0, 0, 0, 0], sizes = [2, 1, 3, 110], strides = [1, 1, 1, 1]} : vector<2x4x3x110xf32> to vector<2x1x3x110xf32>
    %112 = vector.shape_cast %111 : vector<2x1x3x110xf32> to vector<2x3x110xf32>
    %113 = vector.broadcast %110 : f32 to vector<2x3x110xf32>
    %114 = arith.mulf %113, %112 : vector<2x3x110xf32>
    %c3_47 = arith.constant 3 : index
    %c1_48 = arith.constant 1 : index
    %115 = memref.load %arg2[%c3_47, %c1_48] : memref<8x4xf32, #tpu.memory_space<smem>>
    %116 = vector.extract_strided_slice %22 {offsets = [0, 1, 0, 0], sizes = [2, 1, 3, 110], strides = [1, 1, 1, 1]} : vector<2x4x3x110xf32> to vector<2x1x3x110xf32>
    %117 = vector.shape_cast %116 : vector<2x1x3x110xf32> to vector<2x3x110xf32>
    %118 = vector.broadcast %115 : f32 to vector<2x3x110xf32>
    %119 = arith.mulf %118, %117 : vector<2x3x110xf32>
    %120 = arith.addf %114, %119 : vector<2x3x110xf32>
    %c3_49 = arith.constant 3 : index
    %c2_50 = arith.constant 2 : index
    %121 = memref.load %arg2[%c3_49, %c2_50] : memref<8x4xf32, #tpu.memory_space<smem>>
    %122 = vector.extract_strided_slice %22 {offsets = [0, 2, 0, 0], sizes = [2, 1, 3, 110], strides = [1, 1, 1, 1]} : vector<2x4x3x110xf32> to vector<2x1x3x110xf32>
    %123 = vector.shape_cast %122 : vector<2x1x3x110xf32> to vector<2x3x110xf32>
    %124 = vector.broadcast %121 : f32 to vector<2x3x110xf32>
    %125 = arith.mulf %124, %123 : vector<2x3x110xf32>
    %126 = arith.addf %120, %125 : vector<2x3x110xf32>
    %c3_51 = arith.constant 3 : index
    %c3_52 = arith.constant 3 : index
    %127 = memref.load %arg2[%c3_51, %c3_52] : memref<8x4xf32, #tpu.memory_space<smem>>
    %128 = vector.extract_strided_slice %22 {offsets = [0, 3, 0, 0], sizes = [2, 1, 3, 110], strides = [1, 1, 1, 1]} : vector<2x4x3x110xf32> to vector<2x1x3x110xf32>
    %129 = vector.shape_cast %128 : vector<2x1x3x110xf32> to vector<2x3x110xf32>
    %130 = vector.broadcast %127 : f32 to vector<2x3x110xf32>
    %131 = arith.mulf %130, %129 : vector<2x3x110xf32>
    %132 = arith.addf %126, %131 : vector<2x3x110xf32>
    %c3_53 = arith.constant 3 : index
    %133 = memref.load %arg3[%c3_53] : memref<8xf32, #tpu.memory_space<smem>>
    %134 = vector.broadcast %133 : f32 to vector<2x3x110xf32>
    %135 = arith.addf %132, %134 : vector<2x3x110xf32>
    %c0_54 = arith.constant 0 : index
    %c3_55 = arith.constant 3 : index
    %c0_56 = arith.constant 0 : index
    %c0_57 = arith.constant 0 : index
    %136 = vector.load %arg4[%c0_54, %c3_55, %c0_56, %c0_57] : memref<2x8x3x110xf32, #tpu.memory_space<vmem>>, vector<2x1x3x110xf32>
    %137 = vector.shape_cast %136 : vector<2x1x3x110xf32> to vector<2x3x110xf32>
    %138 = vector.shape_cast %135 : vector<2x3x110xf32> to vector<2x1x3x110xf32>
    tpu.vector_store %arg4[%c0_54, %c3_55, %c0_56, %c0_57], %138 {strides = array<i32>} : memref<2x8x3x110xf32, #tpu.memory_space<vmem>>, vector<2x1x3x110xf32>,
    %c4 = arith.constant 4 : index
    %c0_58 = arith.constant 0 : index
    %139 = memref.load %arg2[%c4, %c0_58] : memref<8x4xf32, #tpu.memory_space<smem>>
    %140 = vector.extract_strided_slice %22 {offsets = [0, 0, 0, 0], sizes = [2, 1, 3, 110], strides = [1, 1, 1, 1]} : vector<2x4x3x110xf32> to vector<2x1x3x110xf32>
    %141 = vector.shape_cast %140 : vector<2x1x3x110xf32> to vector<2x3x110xf32>
    %142 = vector.broadcast %139 : f32 to vector<2x3x110xf32>
    %143 = arith.mulf %142, %141 : vector<2x3x110xf32>
    %c4_59 = arith.constant 4 : index
    %c1_60 = arith.constant 1 : index
    %144 = memref.load %arg2[%c4_59, %c1_60] : memref<8x4xf32, #tpu.memory_space<smem>>
    %145 = vector.extract_strided_slice %22 {offsets = [0, 1, 0, 0], sizes = [2, 1, 3, 110], strides = [1, 1, 1, 1]} : vector<2x4x3x110xf32> to vector<2x1x3x110xf32>
    %146 = vector.shape_cast %145 : vector<2x1x3x110xf32> to vector<2x3x110xf32>
    %147 = vector.broadcast %144 : f32 to vector<2x3x110xf32>
    %148 = arith.mulf %147, %146 : vector<2x3x110xf32>
    %149 = arith.addf %143, %148 : vector<2x3x110xf32>
    %c4_61 = arith.constant 4 : index
    %c2_62 = arith.constant 2 : index
    %150 = memref.load %arg2[%c4_61, %c2_62] : memref<8x4xf32, #tpu.memory_space<smem>>
    %151 = vector.extract_strided_slice %22 {offsets = [0, 2, 0, 0], sizes = [2, 1, 3, 110], strides = [1, 1, 1, 1]} : vector<2x4x3x110xf32> to vector<2x1x3x110xf32>
    %152 = vector.shape_cast %151 : vector<2x1x3x110xf32> to vector<2x3x110xf32>
    %153 = vector.broadcast %150 : f32 to vector<2x3x110xf32>
    %154 = arith.mulf %153, %152 : vector<2x3x110xf32>
    %155 = arith.addf %149, %154 : vector<2x3x110xf32>
    %c4_63 = arith.constant 4 : index
    %c3_64 = arith.constant 3 : index
    %156 = memref.load %arg2[%c4_63, %c3_64] : memref<8x4xf32, #tpu.memory_space<smem>>
    %157 = vector.extract_strided_slice %22 {offsets = [0, 3, 0, 0], sizes = [2, 1, 3, 110], strides = [1, 1, 1, 1]} : vector<2x4x3x110xf32> to vector<2x1x3x110xf32>
    %158 = vector.shape_cast %157 : vector<2x1x3x110xf32> to vector<2x3x110xf32>
    %159 = vector.broadcast %156 : f32 to vector<2x3x110xf32>
    %160 = arith.mulf %159, %158 : vector<2x3x110xf32>
    %161 = arith.addf %155, %160 : vector<2x3x110xf32>
    %c4_65 = arith.constant 4 : index
    %162 = memref.load %arg3[%c4_65] : memref<8xf32, #tpu.memory_space<smem>>
    %163 = vector.broadcast %162 : f32 to vector<2x3x110xf32>
    %164 = arith.addf %161, %163 : vector<2x3x110xf32>
    %c0_66 = arith.constant 0 : index
    %c4_67 = arith.constant 4 : index
    %c0_68 = arith.constant 0 : index
    %c0_69 = arith.constant 0 : index
    %165 = vector.load %arg4[%c0_66, %c4_67, %c0_68, %c0_69] : memref<2x8x3x110xf32, #tpu.memory_space<vmem>>, vector<2x1x3x110xf32>
    %166 = vector.shape_cast %165 : vector<2x1x3x110xf32> to vector<2x3x110xf32>
    %167 = vector.shape_cast %164 : vector<2x3x110xf32> to vector<2x1x3x110xf32>
    tpu.vector_store %arg4[%c0_66, %c4_67, %c0_68, %c0_69], %167 {strides = array<i32>} : memref<2x8x3x110xf32, #tpu.memory_space<vmem>>, vector<2x1x3x110xf32>,
    %c5 = arith.constant 5 : index
    %c0_70 = arith.constant 0 : index
    %168 = memref.load %arg2[%c5, %c0_70] : memref<8x4xf32, #tpu.memory_space<smem>>
    %169 = vector.extract_strided_slice %22 {offsets = [0, 0, 0, 0], sizes = [2, 1, 3, 110], strides = [1, 1, 1, 1]} : vector<2x4x3x110xf32> to vector<2x1x3x110xf32>
    %170 = vector.shape_cast %169 : vector<2x1x3x110xf32> to vector<2x3x110xf32>
    %171 = vector.broadcast %168 : f32 to vector<2x3x110xf32>
    %172 = arith.mulf %171, %170 : vector<2x3x110xf32>
    %c5_71 = arith.constant 5 : index
    %c1_72 = arith.constant 1 : index
    %173 = memref.load %arg2[%c5_71, %c1_72] : memref<8x4xf32, #tpu.memory_space<smem>>
    %174 = vector.extract_strided_slice %22 {offsets = [0, 1, 0, 0], sizes = [2, 1, 3, 110], strides = [1, 1, 1, 1]} : vector<2x4x3x110xf32> to vector<2x1x3x110xf32>
    %175 = vector.shape_cast %174 : vector<2x1x3x110xf32> to vector<2x3x110xf32>
    %176 = vector.broadcast %173 : f32 to vector<2x3x110xf32>
    %177 = arith.mulf %176, %175 : vector<2x3x110xf32>
    %178 = arith.addf %172, %177 : vector<2x3x110xf32>
    %c5_73 = arith.constant 5 : index
    %c2_74 = arith.constant 2 : index
    %179 = memref.load %arg2[%c5_73, %c2_74] : memref<8x4xf32, #tpu.memory_space<smem>>
    %180 = vector.extract_strided_slice %22 {offsets = [0, 2, 0, 0], sizes = [2, 1, 3, 110], strides = [1, 1, 1, 1]} : vector<2x4x3x110xf32> to vector<2x1x3x110xf32>
    %181 = vector.shape_cast %180 : vector<2x1x3x110xf32> to vector<2x3x110xf32>
    %182 = vector.broadcast %179 : f32 to vector<2x3x110xf32>
    %183 = arith.mulf %182, %181 : vector<2x3x110xf32>
    %184 = arith.addf %178, %183 : vector<2x3x110xf32>
    %c5_75 = arith.constant 5 : index
    %c3_76 = arith.constant 3 : index
    %185 = memref.load %arg2[%c5_75, %c3_76] : memref<8x4xf32, #tpu.memory_space<smem>>
    %186 = vector.extract_strided_slice %22 {offsets = [0, 3, 0, 0], sizes = [2, 1, 3, 110], strides = [1, 1, 1, 1]} : vector<2x4x3x110xf32> to vector<2x1x3x110xf32>
    %187 = vector.shape_cast %186 : vector<2x1x3x110xf32> to vector<2x3x110xf32>
    %188 = vector.broadcast %185 : f32 to vector<2x3x110xf32>
    %189 = arith.mulf %188, %187 : vector<2x3x110xf32>
    %190 = arith.addf %184, %189 : vector<2x3x110xf32>
    %c5_77 = arith.constant 5 : index
    %191 = memref.load %arg3[%c5_77] : memref<8xf32, #tpu.memory_space<smem>>
    %192 = vector.broadcast %191 : f32 to vector<2x3x110xf32>
    %193 = arith.addf %190, %192 : vector<2x3x110xf32>
    %c0_78 = arith.constant 0 : index
    %c5_79 = arith.constant 5 : index
    %c0_80 = arith.constant 0 : index
    %c0_81 = arith.constant 0 : index
    %194 = vector.load %arg4[%c0_78, %c5_79, %c0_80, %c0_81] : memref<2x8x3x110xf32, #tpu.memory_space<vmem>>, vector<2x1x3x110xf32>
    %195 = vector.shape_cast %194 : vector<2x1x3x110xf32> to vector<2x3x110xf32>
    %196 = vector.shape_cast %193 : vector<2x3x110xf32> to vector<2x1x3x110xf32>
    tpu.vector_store %arg4[%c0_78, %c5_79, %c0_80, %c0_81], %196 {strides = array<i32>} : memref<2x8x3x110xf32, #tpu.memory_space<vmem>>, vector<2x1x3x110xf32>,
    %c6 = arith.constant 6 : index
    %c0_82 = arith.constant 0 : index
    %197 = memref.load %arg2[%c6, %c0_82] : memref<8x4xf32, #tpu.memory_space<smem>>
    %198 = vector.extract_strided_slice %22 {offsets = [0, 0, 0, 0], sizes = [2, 1, 3, 110], strides = [1, 1, 1, 1]} : vector<2x4x3x110xf32> to vector<2x1x3x110xf32>
    %199 = vector.shape_cast %198 : vector<2x1x3x110xf32> to vector<2x3x110xf32>
    %200 = vector.broadcast %197 : f32 to vector<2x3x110xf32>
    %201 = arith.mulf %200, %199 : vector<2x3x110xf32>
    %c6_83 = arith.constant 6 : index
    %c1_84 = arith.constant 1 : index
    %202 = memref.load %arg2[%c6_83, %c1_84] : memref<8x4xf32, #tpu.memory_space<smem>>
    %203 = vector.extract_strided_slice %22 {offsets = [0, 1, 0, 0], sizes = [2, 1, 3, 110], strides = [1, 1, 1, 1]} : vector<2x4x3x110xf32> to vector<2x1x3x110xf32>
    %204 = vector.shape_cast %203 : vector<2x1x3x110xf32> to vector<2x3x110xf32>
    %205 = vector.broadcast %202 : f32 to vector<2x3x110xf32>
    %206 = arith.mulf %205, %204 : vector<2x3x110xf32>
    %207 = arith.addf %201, %206 : vector<2x3x110xf32>
    %c6_85 = arith.constant 6 : index
    %c2_86 = arith.constant 2 : index
    %208 = memref.load %arg2[%c6_85, %c2_86] : memref<8x4xf32, #tpu.memory_space<smem>>
    %209 = vector.extract_strided_slice %22 {offsets = [0, 2, 0, 0], sizes = [2, 1, 3, 110], strides = [1, 1, 1, 1]} : vector<2x4x3x110xf32> to vector<2x1x3x110xf32>
    %210 = vector.shape_cast %209 : vector<2x1x3x110xf32> to vector<2x3x110xf32>
    %211 = vector.broadcast %208 : f32 to vector<2x3x110xf32>
    %212 = arith.mulf %211, %210 : vector<2x3x110xf32>
    %213 = arith.addf %207, %212 : vector<2x3x110xf32>
    %c6_87 = arith.constant 6 : index
    %c3_88 = arith.constant 3 : index
    %214 = memref.load %arg2[%c6_87, %c3_88] : memref<8x4xf32, #tpu.memory_space<smem>>
    %215 = vector.extract_strided_slice %22 {offsets = [0, 3, 0, 0], sizes = [2, 1, 3, 110], strides = [1, 1, 1, 1]} : vector<2x4x3x110xf32> to vector<2x1x3x110xf32>
    %216 = vector.shape_cast %215 : vector<2x1x3x110xf32> to vector<2x3x110xf32>
    %217 = vector.broadcast %214 : f32 to vector<2x3x110xf32>
    %218 = arith.mulf %217, %216 : vector<2x3x110xf32>
    %219 = arith.addf %213, %218 : vector<2x3x110xf32>
    %c6_89 = arith.constant 6 : index
    %220 = memref.load %arg3[%c6_89] : memref<8xf32, #tpu.memory_space<smem>>
    %221 = vector.broadcast %220 : f32 to vector<2x3x110xf32>
    %222 = arith.addf %219, %221 : vector<2x3x110xf32>
    %c0_90 = arith.constant 0 : index
    %c6_91 = arith.constant 6 : index
    %c0_92 = arith.constant 0 : index
    %c0_93 = arith.constant 0 : index
    %223 = vector.load %arg4[%c0_90, %c6_91, %c0_92, %c0_93] : memref<2x8x3x110xf32, #tpu.memory_space<vmem>>, vector<2x1x3x110xf32>
    %224 = vector.shape_cast %223 : vector<2x1x3x110xf32> to vector<2x3x110xf32>
    %225 = vector.shape_cast %222 : vector<2x3x110xf32> to vector<2x1x3x110xf32>
    tpu.vector_store %arg4[%c0_90, %c6_91, %c0_92, %c0_93], %225 {strides = array<i32>} : memref<2x8x3x110xf32, #tpu.memory_space<vmem>>, vector<2x1x3x110xf32>,
    %c7 = arith.constant 7 : index
    %c0_94 = arith.constant 0 : index
    %226 = memref.load %arg2[%c7, %c0_94] : memref<8x4xf32, #tpu.memory_space<smem>>
    %227 = vector.extract_strided_slice %22 {offsets = [0, 0, 0, 0], sizes = [2, 1, 3, 110], strides = [1, 1, 1, 1]} : vector<2x4x3x110xf32> to vector<2x1x3x110xf32>
    %228 = vector.shape_cast %227 : vector<2x1x3x110xf32> to vector<2x3x110xf32>
    %229 = vector.broadcast %226 : f32 to vector<2x3x110xf32>
    %230 = arith.mulf %229, %228 : vector<2x3x110xf32>
    %c7_95 = arith.constant 7 : index
    %c1_96 = arith.constant 1 : index
    %231 = memref.load %arg2[%c7_95, %c1_96] : memref<8x4xf32, #tpu.memory_space<smem>>
    %232 = vector.extract_strided_slice %22 {offsets = [0, 1, 0, 0], sizes = [2, 1, 3, 110], strides = [1, 1, 1, 1]} : vector<2x4x3x110xf32> to vector<2x1x3x110xf32>
    %233 = vector.shape_cast %232 : vector<2x1x3x110xf32> to vector<2x3x110xf32>
    %234 = vector.broadcast %231 : f32 to vector<2x3x110xf32>
    %235 = arith.mulf %234, %233 : vector<2x3x110xf32>
    %236 = arith.addf %230, %235 : vector<2x3x110xf32>
    %c7_97 = arith.constant 7 : index
    %c2_98 = arith.constant 2 : index
    %237 = memref.load %arg2[%c7_97, %c2_98] : memref<8x4xf32, #tpu.memory_space<smem>>
    %238 = vector.extract_strided_slice %22 {offsets = [0, 2, 0, 0], sizes = [2, 1, 3, 110], strides = [1, 1, 1, 1]} : vector<2x4x3x110xf32> to vector<2x1x3x110xf32>
    %239 = vector.shape_cast %238 : vector<2x1x3x110xf32> to vector<2x3x110xf32>
    %240 = vector.broadcast %237 : f32 to vector<2x3x110xf32>
    %241 = arith.mulf %240, %239 : vector<2x3x110xf32>
    %242 = arith.addf %236, %241 : vector<2x3x110xf32>
    %c7_99 = arith.constant 7 : index
    %c3_100 = arith.constant 3 : index
    %243 = memref.load %arg2[%c7_99, %c3_100] : memref<8x4xf32, #tpu.memory_space<smem>>
    %244 = vector.extract_strided_slice %22 {offsets = [0, 3, 0, 0], sizes = [2, 1, 3, 110], strides = [1, 1, 1, 1]} : vector<2x4x3x110xf32> to vector<2x1x3x110xf32>
    %245 = vector.shape_cast %244 : vector<2x1x3x110xf32> to vector<2x3x110xf32>
    %246 = vector.broadcast %243 : f32 to vector<2x3x110xf32>
    %247 = arith.mulf %246, %245 : vector<2x3x110xf32>
    %248 = arith.addf %242, %247 : vector<2x3x110xf32>
    %c7_101 = arith.constant 7 : index
    %249 = memref.load %arg3[%c7_101] : memref<8xf32, #tpu.memory_space<smem>>
    %250 = vector.broadcast %249 : f32 to vector<2x3x110xf32>
    %251 = arith.addf %248, %250 : vector<2x3x110xf32>
    %c0_102 = arith.constant 0 : index
    %c7_103 = arith.constant 7 : index
    %c0_104 = arith.constant 0 : index
    %c0_105 = arith.constant 0 : index
    %252 = vector.load %arg4[%c0_102, %c7_103, %c0_104, %c0_105] : memref<2x8x3x110xf32, #tpu.memory_space<vmem>>, vector<2x1x3x110xf32>
    %253 = vector.shape_cast %252 : vector<2x1x3x110xf32> to vector<2x3x110xf32>
    %254 = vector.shape_cast %251 : vector<2x3x110xf32> to vector<2x1x3x110xf32>
    tpu.vector_store %arg4[%c0_102, %c7_103, %c0_104, %c0_105], %254 {strides = array<i32>} : memref<2x8x3x110xf32, #tpu.memory_space<vmem>>, vector<2x1x3x110xf32>,
    return
  }
  func.func @transform_0(%arg0: i32) -> (i32, i32, i32, i32) {
    %c0_i32 = arith.constant 0 : i32
    %c0_i32_0 = arith.constant 0 : i32
    %c0_i32_1 = arith.constant 0 : i32
    %c0_i32_2 = arith.constant 0 : i32
    %c0_i32_3 = arith.constant 0 : i32
    return %c0_i32, %c0_i32_0, %c0_i32_1, %c0_i32_2 : i32, i32, i32, i32
  }
  func.func @transform_1(%arg0: i32) -> (i32, i32) {
    %c0_i32 = arith.constant 0 : i32
    %c0_i32_0 = arith.constant 0 : i32
    %c0_i32_1 = arith.constant 0 : i32
    return %c0_i32, %c0_i32_0 : i32, i32
  }
  func.func @transform_2(%arg0: i32) -> i32 {
    %c0_i32 = arith.constant 0 : i32
    %c0_i32_0 = arith.constant 0 : i32
    return %c0_i32 : i32
  }
  func.func @transform_3(%arg0: i32) -> (i32, i32, i32, i32) {
    %c0_i32 = arith.constant 0 : i32
    %c0_i32_0 = arith.constant 0 : i32
    %c0_i32_1 = arith.constant 0 : i32
    %c0_i32_2 = arith.constant 0 : i32
    %c0_i32_3 = arith.constant 0 : i32
    return %c0_i32, %c0_i32_0, %c0_i32_1, %c0_i32_2 : i32, i32, i32, i32
  }
}

</mosaic_0001>

<llo_original>
// kernel: tpu_custom_call.1
$region0: #{tpu_custom_call.1}
  #allocation0 [shape = 'u32[]', space=smem, size = 0x4, offset = 0x4, fixed_abs, tag = 'smem constant byte address 0x4 - core index']
  #allocation1 [shape = 'u32[144,128]{1,0:T(1,128)}', space=vmem, size = 0x12000, scoped, tag = 'internal scratch']
  %s0 = inlined_call_operand.vmem [shape: f32[2,4,3,110], index: 0, kind: input, shape index: {}]
  %s1 = inlined_call_operand.vmem [shape: f32[8,4], index: 1, kind: input, shape index: {}]
  %s2 = inlined_call_operand.vmem [shape: f32[8], index: 2, kind: input, shape index: {}]
  %s3 = inlined_call_operand.vmem [shape: f32[2,8,3,110], index: 3, kind: output, shape index: {}]
  %s4 = sld [smem:[#allocation0]]
  $region30: #{tpu_custom_call.1} parent=0
    _
  %s6 = ssub.s32 1, %s4
  %s7 = scalar_select 0, %s6, %s4
  $region1: #{tpu_custom_call.1} parent=0
    #allocation2 [shape = 'u8[4096]{0}', space=smem, size = 0x1000, scoped, tag = 'input window, operand 1, single buffered']
    #allocation3 [shape = 's32[1]{0}', space=sflag, size = 0x4, scoped, tag = 'scoped memory for tpu_custom_call.1']
    #allocation4 [shape = 'u8[512]{0}', space=smem, size = 0x200, scoped, tag = 'input window, operand 2, single buffered']
    #allocation5 [shape = 's32[1]{0}', space=sflag, size = 0x4, scoped, tag = 'scoped memory for tpu_custom_call.1']
    %8 = vsyncpa [#allocation3], 0
    %9 = vsyncpa [#allocation5], 0
    // Predicated region
    $region2: #{tpu_custom_call.1} parent=1 // pred_check
      _
    $region3: #{tpu_custom_call.1} parent=1 // pred_check_branch
      %11 = sbr.rel (0) target = $region5
    $region4: #{tpu_custom_call.1} parent=1 // pred_region
      _
    $region5: #{tpu_custom_call.1} parent=1 // pred_fallthru
      _
    // Predicated region
    $region6: #{tpu_custom_call.1} parent=1 // pred_check
      _
    $region7: #{tpu_custom_call.1} parent=1 // pred_check_branch
      %13 = sbr.rel (0) target = $region9
    $region8: #{tpu_custom_call.1} parent=1 // pred_region
      %s15 = ssub.s32 128, 128
      %16 = vsyncadd [#allocation3], %s15
      %s18 = sshll.u32 %s1, 4
      %s19 = int_to_ptr.vmem [resolvable:$true] %s18
      %21 = dma.vmem_to_smem %s19, 128, [#allocation2], [#allocation3]
    $region9: #{tpu_custom_call.1} parent=1 // pred_fallthru
      _
    // Predicated region
    $region10: #{tpu_custom_call.1} parent=1 // pred_check
      _
    $region11: #{tpu_custom_call.1} parent=1 // pred_check_branch
      %23 = sbr.rel (0) target = $region13
    $region12: #{tpu_custom_call.1} parent=1 // pred_region
      %s25 = ssub.s32 16, 16
      %26 = vsyncadd [#allocation5], %s25
      %s28 = sshll.u32 %s2, 4
      %s29 = int_to_ptr.vmem [resolvable:$true] %s28
      %31 = dma.vmem_to_smem %s29, 16, [#allocation4], [#allocation5]
    $region13: #{tpu_custom_call.1} parent=1 // pred_fallthru
      _
    // Predicated region
    $region14: #{tpu_custom_call.1} parent=1 // pred_check
      _
    $region15: #{tpu_custom_call.1} parent=1 // pred_check_branch
      %33 = sbr.rel (0) target = $region17
    $region16: #{tpu_custom_call.1} parent=1 // pred_region
      %34 = dma.done [#allocation3], 128
    $region17: #{tpu_custom_call.1} parent=1 // pred_fallthru
      _
    // Predicated region
    $region18: #{tpu_custom_call.1} parent=1 // pred_check
      _
    $region19: #{tpu_custom_call.1} parent=1 // pred_check_branch
      %36 = sbr.rel (0) target = $region21
    $region20: #{tpu_custom_call.1} parent=1 // pred_region
      %37 = dma.done [#allocation5], 16
    $region21: #{tpu_custom_call.1} parent=1 // pred_fallthru
      _
    %38 = sfence
    %v39 = vld [vmem:[%s0] sm:$0x7]
    %v40 = vld [vmem:[%s0 + $0x4] sm:$0x7]
    %v41 = vld [vmem:[%s0 + $0x8] sm:$0x7]
    %v42 = vld [vmem:[%s0 + $0xc] sm:$0x7]
    %v43 = vld [vmem:[%s0 + $0x10] sm:$0x7]
    %v44 = vld [vmem:[%s0 + $0x14] sm:$0x7]
    %v45 = vld [vmem:[%s0 + $0x18] sm:$0x7]
    %v46 = vld [vmem:[%s0 + $0x1c] sm:$0x7]
    %vm47 = vcmask 894976
    %v48 = vsel %vm47, %v39, 0.0
    %49 = vadd.xlane.f32.xlu0 %v48
    %v50 = vpop.xlane.xlu0 %49
    %v51 = vsel %vm47, %v40, 0.0
    %52 = vadd.xlane.f32.xlu0 %v51
    %v53 = vpop.xlane.xlu0 %52
    %v54 = vsel %vm47, %v41, 0.0
    %55 = vadd.xlane.f32.xlu0 %v54
    %v56 = vpop.xlane.xlu0 %55
    %v57 = vsel %vm47, %v42, 0.0
    %58 = vadd.xlane.f32.xlu0 %v57
    %v59 = vpop.xlane.xlu0 %58
    %v60 = vsel %vm47, %v43, 0.0
    %61 = vadd.xlane.f32.xlu0 %v60
    %v62 = vpop.xlane.xlu0 %61
    %v63 = vsel %vm47, %v44, 0.0
    %64 = vadd.xlane.f32.xlu0 %v63
    %v65 = vpop.xlane.xlu0 %64
    %v66 = vsel %vm47, %v45, 0.0
    %67 = vadd.xlane.f32.xlu0 %v66
    %v68 = vpop.xlane.xlu0 %67
    %v69 = vsel %vm47, %v46, 0.0
    %70 = vadd.xlane.f32.xlu0 %v69
    %v71 = vpop.xlane.xlu0 %70
    %v72 = vmul.f32 %v39, %v39
    %v73 = vmul.f32 %v40, %v40
    %v74 = vmul.f32 %v41, %v41
    %v75 = vmul.f32 %v42, %v42
    %v76 = vmul.f32 %v43, %v43
    %v77 = vmul.f32 %v44, %v44
    %v78 = vmul.f32 %v45, %v45
    %v79 = vmul.f32 %v46, %v46
    %v80 = vsel %vm47, %v72, 0.0
    %81 = vadd.xlane.f32.xlu0 %v80
    %v82 = vpop.xlane.xlu0 %81
    %v83 = vsel %vm47, %v73, 0.0
    %84 = vadd.xlane.f32.xlu0 %v83
    %v85 = vpop.xlane.xlu0 %84
    %v86 = vsel %vm47, %v74, 0.0
    %87 = vadd.xlane.f32.xlu0 %v86
    %v88 = vpop.xlane.xlu0 %87
    %v89 = vsel %vm47, %v75, 0.0
    %90 = vadd.xlane.f32.xlu0 %v89
    %v91 = vpop.xlane.xlu0 %90
    %v92 = vsel %vm47, %v76, 0.0
    %93 = vadd.xlane.f32.xlu0 %v92
    %v94 = vpop.xlane.xlu0 %93
    %v95 = vsel %vm47, %v77, 0.0
    %96 = vadd.xlane.f32.xlu0 %v95
    %v97 = vpop.xlane.xlu0 %96
    %v98 = vsel %vm47, %v78, 0.0
    %99 = vadd.xlane.f32.xlu0 %v98
    %v100 = vpop.xlane.xlu0 %99
    %v101 = vsel %vm47, %v79, 0.0
    %102 = vadd.xlane.f32.xlu0 %v101
    %v103 = vpop.xlane.xlu0 %102
    %v104 = vmul.f32 %v50, 0.009090909
    %v105 = vmul.f32 %v53, 0.009090909
    %v106 = vmul.f32 %v56, 0.009090909
    %v107 = vmul.f32 %v59, 0.009090909
    %v108 = vmul.f32 %v62, 0.009090909
    %v109 = vmul.f32 %v65, 0.009090909
    %v110 = vmul.f32 %v68, 0.009090909
    %v111 = vmul.f32 %v71, 0.009090909
    %v112 = vmul.f32 %v82, 0.009090909
    %v113 = vmul.f32 %v85, 0.009090909
    %v114 = vmul.f32 %v88, 0.009090909
    %v115 = vmul.f32 %v91, 0.009090909
    %v116 = vmul.f32 %v94, 0.009090909
    %v117 = vmul.f32 %v97, 0.009090909
    %v118 = vmul.f32 %v100, 0.009090909
    %v119 = vmul.f32 %v103, 0.009090909
    %v120 = vmul.f32 %v104, %v104
    %v121 = vmul.f32 %v105, %v105
    %v122 = vmul.f32 %v106, %v106
    %v123 = vmul.f32 %v107, %v107
    %v124 = vmul.f32 %v108, %v108
    %v125 = vmul.f32 %v109, %v109
    %v126 = vmul.f32 %v110, %v110
    %v127 = vmul.f32 %v111, %v111
    %v128 = vsub.f32 %v112, %v120
    %v129 = vsub.f32 %v113, %v121
    %v130 = vsub.f32 %v114, %v122
    %v131 = vsub.f32 %v115, %v123
    %v132 = vsub.f32 %v116, %v124
    %v133 = vsub.f32 %v117, %v125
    %v134 = vsub.f32 %v118, %v126
    %v135 = vsub.f32 %v119, %v127
    %v136 = vmax.f32 %v128, 0.0
    %v137 = vmax.f32 %v129, 0.0
    %v138 = vmax.f32 %v130, 0.0
    %v139 = vmax.f32 %v131, 0.0
    %v140 = vmax.f32 %v132, 0.0
    %v141 = vmax.f32 %v133, 0.0
    %v142 = vmax.f32 %v134, 0.0
    %v143 = vmax.f32 %v135, 0.0
    %v144 = vsub.f32 %v39, %v104
    %v145 = vsub.f32 %v40, %v105
    %v146 = vsub.f32 %v41, %v106
    %v147 = vsub.f32 %v42, %v107
    %v148 = vsub.f32 %v43, %v108
    %v149 = vsub.f32 %v44, %v109
    %v150 = vsub.f32 %v45, %v110
    %v151 = vsub.f32 %v46, %v111
    %v152 = vadd.f32 %v136, 1e-05
    %v153 = vadd.f32 %v137, 1e-05
    %v154 = vadd.f32 %v138, 1e-05
    %v155 = vadd.f32 %v139, 1e-05
    %v156 = vadd.f32 %v140, 1e-05
    %v157 = vadd.f32 %v141, 1e-05
    %v158 = vadd.f32 %v142, 1e-05
    %v159 = vadd.f32 %v143, 1e-05
    %v160 = vrsqrt.pop %v152
    %v161 = vrsqrt.pop %v153
    %v162 = vrsqrt.pop %v154
    %v163 = vrsqrt.pop %v155
    %v164 = vrsqrt.pop %v156
    %v165 = vrsqrt.pop %v157
    %v166 = vrsqrt.pop %v158
    %v167 = vrsqrt.pop %v159
    %v168 = vmul.f32 %v144, %v160
    %v169 = vmul.f32 %v145, %v161
    %v170 = vmul.f32 %v146, %v162
    %v171 = vmul.f32 %v147, %v163
    %v172 = vmul.f32 %v148, %v164
    %v173 = vmul.f32 %v149, %v165
    %v174 = vmul.f32 %v150, %v166
    %v175 = vmul.f32 %v151, %v167
    %v176 = vmax.f32 %v168, 0.0
    %v177 = vmax.f32 %v169, 0.0
    %v178 = vmax.f32 %v170, 0.0
    %v179 = vmax.f32 %v171, 0.0
    %v180 = vmax.f32 %v172, 0.0
    %v181 = vmax.f32 %v173, 0.0
    %v182 = vmax.f32 %v174, 0.0
    %v183 = vmax.f32 %v175, 0.0
    %s184 = sld [smem:[#allocation2]]
    %v185 = vstv %s184
    %v186 = vmul.f32 %v185, %v176
    %v187 = vmul.f32 %v185, %v180
    %s188 = sld [smem:[#allocation2 + $0x1]]
    %v189 = vstv %s188
    %v190 = vmul.f32 %v189, %v177
    %v191 = vmul.f32 %v189, %v181
    %v192 = vadd.f32 %v186, %v190
    %v193 = vadd.f32 %v187, %v191
    %s194 = sld [smem:[#allocation2 + $0x2]]
    %v195 = vstv %s194
    %v196 = vmul.f32 %v195, %v178
    %v197 = vmul.f32 %v195, %v182
    %v198 = vadd.f32 %v192, %v196
    %v199 = vadd.f32 %v193, %v197
    %s200 = sld [smem:[#allocation2 + $0x3]]
    %v201 = vstv %s200
    %v202 = vmul.f32 %v201, %v179
    %v203 = vmul.f32 %v201, %v183
    %v204 = vadd.f32 %v198, %v202
    %v205 = vadd.f32 %v199, %v203
    %s206 = sld [smem:[#allocation4]]
    %v207 = vstv %s206
    %v208 = vadd.f32 %v204, %v207
    %v209 = vadd.f32 %v205, %v207
    %210 = vst.msk [vmem:[%s3] sm:$0x7] %vm47, %v208
    %211 = vst.msk [vmem:[%s3 + $0x20] sm:$0x7] %vm47, %v209
    %s212 = sld [smem:[#allocation2 + $0x80]]
    %v213 = vstv %s212
    %v214 = vmul.f32 %v213, %v176
    %v215 = vmul.f32 %v213, %v180
    %s216 = sld [smem:[#allocation2 + $0x81]]
    %v217 = vstv %s216
    %v218 = vmul.f32 %v217, %v177
    %v219 = vmul.f32 %v217, %v181
    %v220 = vadd.f32 %v214, %v218
    %v221 = vadd.f32 %v215, %v219
    %s222 = sld [smem:[#allocation2 + $0x82]]
    %v223 = vstv %s222
    %v224 = vmul.f32 %v223, %v178
    %v225 = vmul.f32 %v223, %v182
    %v226 = vadd.f32 %v220, %v224
    %v227 = vadd.f32 %v221, %v225
    %s228 = sld [smem:[#allocation2 + $0x83]]
    %v229 = vstv %s228
    %v230 = vmul.f32 %v229, %v179
    %v231 = vmul.f32 %v229, %v183
    %v232 = vadd.f32 %v226, %v230
    %v233 = vadd.f32 %v227, %v231
    %s234 = sld [smem:[#allocation4 + $0x1]]
    %v235 = vstv %s234
    %v236 = vadd.f32 %v232, %v235
    %v237 = vadd.f32 %v233, %v235
    %s238 = scalar_lea.vmem %s3, 4
    %239 = vst.msk [vmem:[%s238] sm:$0x7] %vm47, %v236
    %240 = vst.msk [vmem:[%s238 + $0x20] sm:$0x7] %vm47, %v237
    %s241 = sld [smem:[#allocation2 + $0x100]]
    %v242 = vstv %s241
    %v243 = vmul.f32 %v242, %v176
    %v244 = vmul.f32 %v242, %v180
    %s245 = sld [smem:[#allocation2 + $0x101]]
    %v246 = vstv %s245
    %v247 = vmul.f32 %v246, %v177
    %v248 = vmul.f32 %v246, %v181
    %v249 = vadd.f32 %v243, %v247
    %v250 = vadd.f32 %v244, %v248
    %s251 = sld [smem:[#allocation2 + $0x102]]
    %v252 = vstv %s251
    %v253 = vmul.f32 %v252, %v178
    %v254 = vmul.f32 %v252, %v182
    %v255 = vadd.f32 %v249, %v253
    %v256 = vadd.f32 %v250, %v254
    %s257 = sld [smem:[#allocation2 + $0x103]]
    %v258 = vstv %s257
    %v259 = vmul.f32 %v258, %v179
    %v260 = vmul.f32 %v258, %v183
    %v261 = vadd.f32 %v255, %v259
    %v262 = vadd.f32 %v256, %v260
    %s263 = sld [smem:[#allocation4 + $0x2]]
    %v264 = vstv %s263
    %v265 = vadd.f32 %v261, %v264
    %v266 = vadd.f32 %v262, %v264
    %s267 = scalar_lea.vmem %s3, 8
    %268 = vst.msk [vmem:[%s267] sm:$0x7] %vm47, %v265
    %269 = vst.msk [vmem:[%s267 + $0x20] sm:$0x7] %vm47, %v266
    %s270 = sld [smem:[#allocation2 + $0x180]]
    %v271 = vstv %s270
    %v272 = vmul.f32 %v271, %v176
    %v273 = vmul.f32 %v271, %v180
    %s274 = sld [smem:[#allocation2 + $0x181]]
    %v275 = vstv %s274
    %v276 = vmul.f32 %v275, %v177
    %v277 = vmul.f32 %v275, %v181
    %v278 = vadd.f32 %v272, %v276
    %v279 = vadd.f32 %v273, %v277
    %s280 = sld [smem:[#allocation2 + $0x182]]
    %v281 = vstv %s280
    %v282 = vmul.f32 %v281, %v178
    %v283 = vmul.f32 %v281, %v182
    %v284 = vadd.f32 %v278, %v282
    %v285 = vadd.f32 %v279, %v283
    %s286 = sld [smem:[#allocation2 + $0x183]]
    %v287 = vstv %s286
    %v288 = vmul.f32 %v287, %v179
    %v289 = vmul.f32 %v287, %v183
    %v290 = vadd.f32 %v284, %v288
    %v291 = vadd.f32 %v285, %v289
    %s292 = sld [smem:[#allocation4 + $0x3]]
    %v293 = vstv %s292
    %v294 = vadd.f32 %v290, %v293
    %v295 = vadd.f32 %v291, %v293
    %s296 = scalar_lea.vmem %s3, 12
    %297 = vst.msk [vmem:[%s296] sm:$0x7] %vm47, %v294
    %298 = vst.msk [vmem:[%s296 + $0x20] sm:$0x7] %vm47, %v295
    %s299 = sld [smem:[#allocation2 + $0x200]]
    %v300 = vstv %s299
    %v301 = vmul.f32 %v300, %v176
    %v302 = vmul.f32 %v300, %v180
    %s303 = sld [smem:[#allocation2 + $0x201]]
    %v304 = vstv %s303
    %v305 = vmul.f32 %v304, %v177
    %v306 = vmul.f32 %v304, %v181
    %v307 = vadd.f32 %v301, %v305
    %v308 = vadd.f32 %v302, %v306
    %s309 = sld [smem:[#allocation2 + $0x202]]
    %v310 = vstv %s309
    %v311 = vmul.f32 %v310, %v178
    %v312 = vmul.f32 %v310, %v182
    %v313 = vadd.f32 %v307, %v311
    %v314 = vadd.f32 %v308, %v312
    %s315 = sld [smem:[#allocation2 + $0x203]]
    %v316 = vstv %s315
    %v317 = vmul.f32 %v316, %v179
    %v318 = vmul.f32 %v316, %v183
    %v319 = vadd.f32 %v313, %v317
    %v320 = vadd.f32 %v314, %v318
    %s321 = sld [smem:[#allocation4 + $0x4]]
    %v322 = vstv %s321
    %v323 = vadd.f32 %v319, %v322
    %v324 = vadd.f32 %v320, %v322
    %s325 = scalar_lea.vmem %s3, 16
    %326 = vst.msk [vmem:[%s325] sm:$0x7] %vm47, %v323
    %327 = vst.msk [vmem:[%s325 + $0x20] sm:$0x7] %vm47, %v324
    %s328 = sld [smem:[#allocation2 + $0x280]]
    %v329 = vstv %s328
    %v330 = vmul.f32 %v329, %v176
    %v331 = vmul.f32 %v329, %v180
    %s332 = sld [smem:[#allocation2 + $0x281]]
    %v333 = vstv %s332
    %v334 = vmul.f32 %v333, %v177
    %v335 = vmul.f32 %v333, %v181
    %v336 = vadd.f32 %v330, %v334
    %v337 = vadd.f32 %v331, %v335
    %s338 = sld [smem:[#allocation2 + $0x282]]
    %v339 = vstv %s338
    %v340 = vmul.f32 %v339, %v178
    %v341 = vmul.f32 %v339, %v182
    %v342 = vadd.f32 %v336, %v340
    %v343 = vadd.f32 %v337, %v341
    %s344 = sld [smem:[#allocation2 + $0x283]]
    %v345 = vstv %s344
    %v346 = vmul.f32 %v345, %v179
    %v347 = vmul.f32 %v345, %v183
    %v348 = vadd.f32 %v342, %v346
    %v349 = vadd.f32 %v343, %v347
    %s350 = sld [smem:[#allocation4 + $0x5]]
    %v351 = vstv %s350
    %v352 = vadd.f32 %v348, %v351
    %v353 = vadd.f32 %v349, %v351
    %s354 = scalar_lea.vmem %s3, 20
    %355 = vst.msk [vmem:[%s354] sm:$0x7] %vm47, %v352
    %356 = vst.msk [vmem:[%s354 + $0x20] sm:$0x7] %vm47, %v353
    %s357 = sld [smem:[#allocation2 + $0x300]]
    %v358 = vstv %s357
    %v359 = vmul.f32 %v358, %v176
    %v360 = vmul.f32 %v358, %v180
    %s361 = sld [smem:[#allocation2 + $0x301]]
    %v362 = vstv %s361
    %v363 = vmul.f32 %v362, %v177
    %v364 = vmul.f32 %v362, %v181
    %v365 = vadd.f32 %v359, %v363
    %v366 = vadd.f32 %v360, %v364
    %s367 = sld [smem:[#allocation2 + $0x302]]
    %v368 = vstv %s367
    %v369 = vmul.f32 %v368, %v178
    %v370 = vmul.f32 %v368, %v182
    %v371 = vadd.f32 %v365, %v369
    %v372 = vadd.f32 %v366, %v370
    %s373 = sld [smem:[#allocation2 + $0x303]]
    %v374 = vstv %s373
    %v375 = vmul.f32 %v374, %v179
    %v376 = vmul.f32 %v374, %v183
    %v377 = vadd.f32 %v371, %v375
    %v378 = vadd.f32 %v372, %v376
    %s379 = sld [smem:[#allocation4 + $0x6]]
    %v380 = vstv %s379
    %v381 = vadd.f32 %v377, %v380
    %v382 = vadd.f32 %v378, %v380
    %s383 = scalar_lea.vmem %s3, 24
    %384 = vst.msk [vmem:[%s383] sm:$0x7] %vm47, %v381
    %385 = vst.msk [vmem:[%s383 + $0x20] sm:$0x7] %vm47, %v382
    %s386 = sld [smem:[#allocation2 + $0x380]]
    %v387 = vstv %s386
    %v388 = vmul.f32 %v387, %v176
    %v389 = vmul.f32 %v387, %v180
    %s390 = sld [smem:[#allocation2 + $0x381]]
    %v391 = vstv %s390
    %v392 = vmul.f32 %v391, %v177
    %v393 = vmul.f32 %v391, %v181
    %v394 = vadd.f32 %v388, %v392
    %v395 = vadd.f32 %v389, %v393
    %s396 = sld [smem:[#allocation2 + $0x382]]
    %v397 = vstv %s396
    %v398 = vmul.f32 %v397, %v178
    %v399 = vmul.f32 %v397, %v182
    %v400 = vadd.f32 %v394, %v398
    %v401 = vadd.f32 %v395, %v399
    %s402 = sld [smem:[#allocation2 + $0x383]]
    %v403 = vstv %s402
    %v404 = vmul.f32 %v403, %v179
    %v405 = vmul.f32 %v403, %v183
    %v406 = vadd.f32 %v400, %v404
    %v407 = vadd.f32 %v401, %v405
    %s408 = sld [smem:[#allocation4 + $0x7]]
    %v409 = vstv %s408
    %v410 = vadd.f32 %v406, %v409
    %v411 = vadd.f32 %v407, %v409
    %s412 = scalar_lea.vmem %s3, 28
    %413 = vst.msk [vmem:[%s412] sm:$0x7] %vm47, %v410
    %414 = vst.msk [vmem:[%s412 + $0x20] sm:$0x7] %vm47, %v411
    // Predicated region
    $region22: #{tpu_custom_call.1} parent=1 // pred_check
      _
    $region23: #{tpu_custom_call.1} parent=1 // pred_check_branch
      %416 = sbr.rel (0) target = $region25
    $region24: #{tpu_custom_call.1} parent=1 // pred_region
      _
    $region25: #{tpu_custom_call.1} parent=1 // pred_fallthru
      _
    // Predicated region
    $region26: #{tpu_custom_call.1} parent=1 // pred_check
      _
    $region27: #{tpu_custom_call.1} parent=1 // pred_check_branch
      %418 = sbr.rel (0) target = $region29
    $region28: #{tpu_custom_call.1} parent=1 // pred_region
      _
    $region29: #{tpu_custom_call.1} parent=1 // pred_fallthru
      _
    %419 = vsyncpa [#allocation3], 1
    %420 = vsyncpa [#allocation5], 1

</llo_original>
